<compile_context>
chip_gen: v7x
topology: tpu7x:2x2x1
jax: 0.10.0
libtpu: 0.0.40
codegen_flags: <defaults>
</compile_context>

<pallas_src>
import functools
from collections import OrderedDict

import jax
import jax.numpy as jnp
import numpy as np
from jax.experimental import pallas as pl
from jax.experimental.pallas import tpu as pltpu


# ----------------------------------------------------------------------------
# Helpers
# ----------------------------------------------------------------------------

def _ceil_div(a: int, b: int) -> int:
    return -(-a // b)


def _lane_round(f: int) -> int:
    """Round a feature width up to the 128-lane VMEM granule."""
    return _ceil_div(f, 128) * 128


def _sublane(itemsize: int) -> int:
    """Sublane group size for a dtype: 8 rows for 4-byte, 16 for 2-byte, ..."""
    return 8 * max(1, 4 // itemsize)


def _vmem_budget_and_limit():
    """Per-generation VMEM tile budget and scoped-VMEM limit.

    v5e/v6e have 128 MiB physical VMEM -> ~24 MiB tile budget; v7x has 64 MiB
    per TensorCore -> ~16 MiB.  The scoped limit is raised (but kept well under
    physical) so the budget is actually usable on v5e's 16 MiB default.
    """
    try:
        info = pltpu.get_tpu_info()
        vmem_phys = int(getattr(info, "vmem_capacity_bytes", 0)) or (64 << 20)
    except Exception:
        vmem_phys = 64 << 20  # conservative: v7x per-core VMEM
    budget = max(8 << 20, min(vmem_phys // 4, 24 << 20))
    vmem_limit = int(min(vmem_phys * 3 // 4, max(32 << 20, 2 * budget)))
    return budget, vmem_limit


# ----------------------------------------------------------------------------
# Standalone concat kernel (opt-in; pure HBM copy, at best matches XLA concat)
# ----------------------------------------------------------------------------

# Below this many output bytes, cat_modes uses XLA's concatenate by default:
# the Pallas launch + HBM->VMEM->HBM round trip cannot win against a copy
# that XLA may fuse into its neighbours entirely.
_PALLAS_CONCAT_MIN_BYTES = 4 << 20

# Target HBM traffic (read + write) per grid step; sized so the ~0.35 us
# per-step pipeline overhead is amortized even at v7x's ~3.2 TB/s.
_TARGET_STEP_BYTES = 4 << 20


def _cat_kernel(*refs, lane_pad: int):
    """Concatenate input tiles along the lane axis; write one lane-dense tile.

    The full output row (padded with zeros to a 128-lane multiple) is built in
    registers and written with a single unmasked store per tile.
    """
    *in_refs, out_ref = refs
    parts = [r[...] for r in in_refs]
    if lane_pad:
        rows = in_refs[0].shape[0]
        parts.append(jnp.zeros((rows, lane_pad), out_ref.dtype))
    out_ref[...] = jnp.concatenate(parts, axis=-1)


def _pallas_cat(modes):
    """torch.cat(modes, dim=1) for a list of [B, F_i] arrays, as a Pallas kernel."""
    batch = int(modes[0].shape[0])
    dtype = jnp.result_type(*modes)
    modes = [m.astype(dtype) for m in modes]
    feature_sizes = [int(m.shape[1]) for m in modes]
    total_f = int(sum(feature_sizes))
    itemsize = jnp.dtype(dtype).itemsize
    sublane = _sublane(itemsize)

    # Lane-padded output width so every output tile store is an unmasked vst.
    padded_total = _lane_round(total_f)
    lane_pad = padded_total - total_f

    # Real per-row VMEM footprint of one grid step: every input block occupies
    # ceil(F_i/128)*128 lanes in VMEM (narrow modes are padded), the output
    # occupies padded_total lanes, and the pipeline double-buffers everything.
    budget, vmem_limit = _vmem_budget_and_limit()
    padded_in = sum(_lane_round(f) for f in feature_sizes)
    vmem_per_row = 2 * (padded_in + padded_total) * itemsize
    max_rows_by_budget = max(sublane, budget // max(1, vmem_per_row))

    # Size the tile by bytes of useful HBM traffic per step, not by row count.
    traffic_per_row = 2 * total_f * itemsize
    rows_for_target = _ceil_div(_TARGET_STEP_BYTES, max(1, traffic_per_row))
    row_tile = min(batch, max_rows_by_budget, max(rows_for_target, sublane))

    if row_tile < batch:
        # Tiled path: round to the sublane group (full-array blocks are always
        # legal, so only round when actually tiling) ...
        row_tile = max(sublane, (row_tile // sublane) * sublane)
        # ... and avoid a tiny ragged final step (< one sublane group of rows).
        rem = batch % row_tile
        while rem != 0 and rem < sublane and row_tile > sublane:
            row_tile -= sublane
            rem = batch % row_tile

    grid = (_ceil_div(batch, row_tile),)

    in_specs = [
        pl.BlockSpec((row_tile, f), lambda i: (i, 0)) for f in feature_sizes
    ]
    out_spec = pl.BlockSpec((row_tile, padded_total), lambda i: (i, 0))

    out = pl.pallas_call(
        functools.partial(_cat_kernel, lane_pad=lane_pad),
        out_shape=jax.ShapeDtypeStruct((batch, padded_total), dtype),
        grid=grid,
        in_specs=in_specs,
        out_specs=out_spec,
        cost_estimate=pl.CostEstimate(
            flops=0,
            transcendentals=0,
            bytes_accessed=2 * batch * total_f * itemsize,
        ),
        compiler_params=pltpu.CompilerParams(
            # Batch axis is embarrassingly parallel; with >=2 grid steps it can
            # shard across v7x's two TensorCores (a pure copy is HBM-bound, so
            # this mainly hides DMA-issue overhead). No-op on v5e/v6e or with
            # a single-step grid.
            dimension_semantics=("parallel",),
            vmem_limit_bytes=vmem_limit,
        ),
    )(*modes)

    if lane_pad:
        out = out[:, :total_f]
    return out


# ----------------------------------------------------------------------------
# Fused concat + linear kernel (the high-value path for subclasses' forward())
# ----------------------------------------------------------------------------

def _make_fused_kernel(num_modes: int, has_bias: bool):
    def kernel(*refs):
        x_refs = refs[:num_modes]
        w_refs = refs[num_modes:2 * num_modes]
        idx = 2 * num_modes
        bias_ref = refs[idx] if has_bias else None
        out_ref = refs[idx + 1] if has_bias else refs[idx]

        acc = jnp.dot(x_refs[0][...], w_refs[0][...],
                      preferred_element_type=jnp.float32)
        for xr, wr in zip(x_refs[1:], w_refs[1:]):
            acc += jnp.dot(xr[...], wr[...], preferred_element_type=jnp.float32)
        if has_bias:
            acc += bias_ref[...].astype(jnp.float32)  # (1, tn) broadcasts
        out_ref[...] = acc.astype(out_ref.dtype)

    return kernel


def _fused_cat_linear(modes, weight, bias=None, *, tm=256, tn=256):
    """concat(modes, axis=1) @ weight (+ bias) without materializing the concat.

    Each mode is a separate LHS input with its own BlockSpec; the weight is
    split (once, outside the kernel) into per-mode row slices so the kernel
    accumulates sum_i (x_i @ W_i) entirely in registers -> the [B, total_f]
    concat never touches HBM and the op is MXU-bound.
    """
    dtype = jnp.result_type(*modes, weight)
    modes = [m.astype(dtype) for m in modes]
    weight = weight.astype(dtype)
    feature_sizes = [int(m.shape[1]) for m in modes]
    total_f = int(sum(feature_sizes))
    batch = int(modes[0].shape[0])
    k_w, n_out = int(weight.shape[0]), int(weight.shape[1])
    if k_w != total_f:
        raise ValueError(f"weight rows {k_w} != sum of mode features {total_f}")
    itemsize = jnp.dtype(dtype).itemsize
    sublane = _sublane(itemsize)

    # Per-mode weight slices (done once; in a real model these live as
    # separate parameters so no runtime slicing is needed at all).
    offsets = np.cumsum([0] + feature_sizes[:-1])
    w_slices = [
        jax.lax.slice(weight, (int(o), 0), (int(o) + f, n_out))
        for o, f in zip(offsets, feature_sizes)
    ]

    tm = min(tm, batch)
    tn = min(tn, n_out)
    if tm < batch:
        tm = max(sublane, (tm // sublane) * sublane)
    if tn < n_out:
        tn = max(128, (tn // 128) * 128)
    grid = (_ceil_div(batch, tm), _ceil_div(n_out, tn))

    in_specs = [pl.BlockSpec((tm, f), lambda m, n: (m, 0)) for f in feature_sizes]
    in_specs += [pl.BlockSpec((f, tn), lambda m, n: (0, n)) for f in feature_sizes]
    operands = list(modes) + list(w_slices)

    has_bias = bias is not None
    if has_bias:
        bias2d = jnp.asarray(bias).astype(dtype).reshape(1, n_out)
        in_specs.append(pl.BlockSpec((1, tn), lambda m, n: (0, n)))
        operands.append(bias2d)

    out_spec = pl.BlockSpec((tm, tn), lambda m, n: (m, n))

    # TODO(synk): for very large total_f (weights that do not fit VMEM per
    # column tile), add a K-reduction grid axis over per-mode chunks with an
    # accumulator scratch; not needed at pvnet linear-network sizes.
    return pl.pallas_call(
        _make_fused_kernel(len(modes), has_bias),
        out_shape=jax.ShapeDtypeStruct((batch, n_out), dtype),
        grid=grid,
        in_specs=in_specs,
        out_specs=out_spec,
        cost_estimate=pl.CostEstimate(
            flops=2 * batch * total_f * n_out,
            transcendentals=0,
            bytes_accessed=(batch * total_f + total_f * n_out + batch * n_out
                            + (n_out if has_bias else 0)) * itemsize,
        ),
        compiler_params=pltpu.CompilerParams(
            dimension_semantics=("parallel", "parallel"),
        ),
    )(*operands)


# ----------------------------------------------------------------------------
# Module
# ----------------------------------------------------------------------------

class AbstractLinearNetworkPallas:
    """Pallas port of pvnet AbstractLinearNetwork.

    `cat_modes` keeps the reference semantics (concat OrderedDict modes along
    dim=1, pass tensors through).  `forward` is abstract in the reference
    module and remains so; concrete subclasses should prefer `fused_cat_linear`
    over `cat_modes` followed by a matmul.
    """

    def __init__(self, in_features: int, out_features: int):
        # The torch __init__ stores nothing; kept for interface parity.
        self.in_features = in_features
        self.out_features = out_features

    def cat_modes(self, x, *, force_pallas: bool = False):
        """Concatenate modes of input data into a 1D feature vector per batch."""
        if isinstance(x, OrderedDict):
            modes = [v for _, v in x.items()]
            dtype = jnp.result_type(*modes)
            out_bytes = (
                int(modes[0].shape[0])
                * sum(int(m.shape[1]) for m in modes)
                * jnp.dtype(dtype).itemsize
            )
            if force_pallas or out_bytes >= _PALLAS_CONCAT_MIN_BYTES:
                return _pallas_cat(modes)
            # Default: XLA's concatenate can fuse with neighbouring ops and
            # skip a materialization entirely, which a standalone copy kernel
            # can never beat.
            return jnp.concatenate(modes, axis=1)
        elif isinstance(x, (jax.Array, np.ndarray)):
            return jnp.asarray(x)
        else:
            raise ValueError(f"Input of unexpected type {type(x)}")

    def fused_cat_linear(self, x, weight, bias=None, *, tm=256, tn=256):
        """cat_modes(x) @ weight (+ bias) with the concat fused into the matmul."""
        if isinstance(x, OrderedDict):
            modes = [v for _, v in x.items()]
        elif isinstance(x, (list, tuple)):
            modes = [jnp.asarray(v) for v in x]
        elif isinstance(x, (jax.Array, np.ndarray)):
            modes = [jnp.asarray(x)]
        else:
            raise ValueError(f"Input of unexpected type {type(x)}")
        return _fused_cat_linear(modes, weight, bias, tm=tm, tn=tn)

    def forward(self, x):
        """Abstract in the reference module."""
        # TODO(synk): forward() is @abstractmethod in the PyTorch class; concrete
        # subclasses should call fused_cat_linear (per-mode partial sums) instead
        # of materializing cat_modes' output before their first matmul.
        raise NotImplementedError


# ----------------------------------------------------------------------------
# Demo / self-test
# ----------------------------------------------------------------------------

if __name__ == "__main__":
    key = jax.random.PRNGKey(0)
    k1, k2, k3, kw, kb = jax.random.split(key, 5)

    batch = 16
    modes = OrderedDict(
        [
            ("sat", jax.random.normal(k1, (batch, 32), dtype=jnp.float32)),
            ("nwp", jax.random.normal(k2, (batch, 48), dtype=jnp.float32)),
            ("pv", jax.random.normal(k3, (batch, 16), dtype=jnp.float32)),
        ]
    )
    in_features = sum(v.shape[1] for v in modes.values())  # 96
    out_features = 8

    net = AbstractLinearNetworkPallas(in_features, out_features)
    ref_cat = jnp.concatenate(list(modes.values()), axis=1)

    # 1) Default cat_modes path (tiny concat -> XLA concatenate).
    out_default = jax.block_until_ready(net.cat_modes(modes))
    assert jnp.array_equal(out_default, ref_cat), "default concat mismatch"

    # 2) Forced Pallas concat (exercises the lane-padded output + slice path).
    out_pl = jax.block_until_ready(net.cat_modes(modes, force_pallas=True))
    assert out_pl.shape == (batch, in_features), out_pl.shape
    assert out_pl.dtype == jnp.float32
    assert jnp.array_equal(out_pl, ref_cat), "pallas concat mismatch"

    # 3) Full-array-block path (batch smaller than the sublane group).
    small = OrderedDict((k, v[:2]) for k, v in modes.items())
    out_small = jax.block_until_ready(net.cat_modes(small, force_pallas=True))
    assert jnp.array_equal(out_small, ref_cat[:2]), "small-batch concat mismatch"

    # 4) Tensor pass-through path.
    passthrough = net.cat_modes(ref_cat)
    assert jnp.array_equal(passthrough, ref_cat)

    # 5) Fused concat + linear (tm=8 -> 2-step batch grid at this demo size).
    weight = jax.random.normal(kw, (in_features, out_features), jnp.float32)
    weight = weight / jnp.sqrt(float(in_features))
    bias = jax.random.normal(kb, (out_features,), jnp.float32)
    out_fused = jax.block_until_ready(
        net.fused_cat_linear(modes, weight, bias, tm=8)
    )
    ref_fused = ref_cat @ weight + bias
    assert out_fused.shape == (batch, out_features), out_fused.shape
    # Loose tolerance: Mosaic and XLA may pick different f32-matmul pass counts
    # (bf16 1x vs 3x/6x); accumulation-order differences are far below this.
    assert jnp.allclose(out_fused, ref_fused, rtol=2e-2, atol=1e-1), (
        "fused cat+linear mismatch"
    )

    print("KERNEL_OK")
</pallas_src>

<mosaic_0001>
module attributes {stable_mosaic.version = 11 : i64} {
  func.func @_cat_kernel(%arg0: i32, %arg1: memref<16x32xf32, #tpu.memory_space<vmem>>, %arg2: memref<16x48xf32, #tpu.memory_space<vmem>>, %arg3: memref<16x16xf32, #tpu.memory_space<vmem>>, %arg4: memref<16x128xf32, #tpu.memory_space<vmem>>) attributes {dimension_semantics = [#tpu.dimension_semantics<parallel>], iteration_bounds = array<i64: 1>, scalar_prefetch = 0 : i64, scratch_operands = 0 : i64, tpu.core_type = #tpu.core_type<tc>, window_params = [{transform_indices = @transform_0, window_bounds = array<i64: 16, 32>}, {transform_indices = @transform_1, window_bounds = array<i64: 16, 48>}, {transform_indices = @transform_2, window_bounds = array<i64: 16, 16>}, {transform_indices = @transform_3, window_bounds = array<i64: 16, 128>}]} {
    %c0 = arith.constant 0 : index
    %c0_0 = arith.constant 0 : index
    %0 = vector.load %arg1[%c0, %c0_0] : memref<16x32xf32, #tpu.memory_space<vmem>>, vector<16x32xf32>
    %c0_1 = arith.constant 0 : index
    %c0_2 = arith.constant 0 : index
    %1 = vector.load %arg2[%c0_1, %c0_2] : memref<16x48xf32, #tpu.memory_space<vmem>>, vector<16x48xf32>
    %c0_3 = arith.constant 0 : index
    %c0_4 = arith.constant 0 : index
    %2 = vector.load %arg3[%c0_3, %c0_4] : memref<16x16xf32, #tpu.memory_space<vmem>>, vector<16x16xf32>
    %cst = arith.constant 0.000000e+00 : f32
    %3 = vector.broadcast %cst : f32 to vector<16x32xf32>
    %4 = tpu.concatenate %0, %1, %2, %3 in 1 : vector<16x32xf32>, vector<16x48xf32>, vector<16x16xf32>, vector<16x32xf32> -> vector<16x128xf32>
    %c0_5 = arith.constant 0 : index
    %c0_6 = arith.constant 0 : index
    %5 = vector.load %arg4[%c0_5, %c0_6] : memref<16x128xf32, #tpu.memory_space<vmem>>, vector<16x128xf32>
    tpu.vector_store %arg4[%c0_5, %c0_6], %4 {strides = array<i32>} : memref<16x128xf32, #tpu.memory_space<vmem>>, vector<16x128xf32>,
    return
  }
  func.func @transform_0(%arg0: i32) -> (i32, i32) {
    %c0_i32 = arith.constant 0 : i32
    %c0_i32_0 = arith.constant 0 : i32
    return %arg0, %c0_i32 : i32, i32
  }
  func.func @transform_1(%arg0: i32) -> (i32, i32) {
    %c0_i32 = arith.constant 0 : i32
    %c0_i32_0 = arith.constant 0 : i32
    return %arg0, %c0_i32 : i32, i32
  }
  func.func @transform_2(%arg0: i32) -> (i32, i32) {
    %c0_i32 = arith.constant 0 : i32
    %c0_i32_0 = arith.constant 0 : i32
    return %arg0, %c0_i32 : i32, i32
  }
  func.func @transform_3(%arg0: i32) -> (i32, i32) {
    %c0_i32 = arith.constant 0 : i32
    %c0_i32_0 = arith.constant 0 : i32
    return %arg0, %c0_i32 : i32, i32
  }
}

</mosaic_0001>

<llo_original>
// kernel: tpu_custom_call.1
$region0: #{tpu_custom_call.1}
  #allocation0 [shape = 'u32[]', space=smem, size = 0x4, offset = 0x4, fixed_abs, tag = 'smem constant byte address 0x4 - core index']
  #allocation1 [shape = 'u32[144,128]{1,0:T(1,128)}', space=vmem, size = 0x12000, scoped, tag = 'internal scratch']
  %s0 = inlined_call_operand.hbm [shape: f32[16,32], index: 0, kind: input, shape index: {}]
  %s1 = inlined_call_operand.hbm [shape: f32[16,48], index: 1, kind: input, shape index: {}]
  %s2 = inlined_call_operand.hbm [shape: f32[16,16], index: 2, kind: input, shape index: {}]
  %s3 = inlined_call_operand.hbm [shape: f32[16,128], index: 3, kind: output, shape index: {}]
  %s4 = sld [smem:[#allocation0]]
  $region34: #{tpu_custom_call.1} parent=0
    _
  %s6 = ssub.s32 1, %s4
  %s7 = scalar_select 0, %s6, %s4
  $region1: #{tpu_custom_call.1} parent=0
    #allocation2 [shape = 'u8[8192]{0}', space=vmem, size = 0x2000, scoped, tag = 'input window, operand 0, single buffered']
    #allocation3 [shape = 's32[1]{0}', space=sflag, size = 0x4, scoped, tag = 'scoped memory for tpu_custom_call.1']
    #allocation4 [shape = 's32[1]{0}', space=sflag, size = 0x4, scoped, tag = 'scoped memory for tpu_custom_call.1']
    #allocation5 [shape = 'u8[8192]{0}', space=vmem, size = 0x2000, scoped, tag = 'input window, operand 1, single buffered']
    #allocation6 [shape = 's32[1]{0}', space=sflag, size = 0x4, scoped, tag = 'scoped memory for tpu_custom_call.1']
    #allocation7 [shape = 'u8[8192]{0}', space=vmem, size = 0x2000, scoped, tag = 'input window, operand 2, single buffered']
    #allocation8 [shape = 'u8[8192]{0}', space=vmem, size = 0x2000, scoped, tag = 'output window, operand 0, single buffered']
    %8 = vsyncpa [#allocation3], 0
    %9 = vsyncpa [#allocation6], 0
    %10 = vsyncpa [#allocation4], 0
    // Predicated region
    $region2: #{tpu_custom_call.1} parent=1 // pred_check
      _
    $region3: #{tpu_custom_call.1} parent=1 // pred_check_branch
      %12 = sbr.rel (0) target = $region5
    $region4: #{tpu_custom_call.1} parent=1 // pred_region
      %s14 = ssub.s32 256, 256
      %15 = vsyncadd [#allocation3], %s14
      %s16 = sshll.u32 [#allocation2], 4
      %s17 = int_to_ptr.vmem [resolvable:$true] %s16
      %22 = dma.hbm_to_vmem [thread:$0]  %s0, 256, %s17, [#allocation3], 128, 128, 8
    $region5: #{tpu_custom_call.1} parent=1 // pred_fallthru
      _
    // Predicated region
    $region6: #{tpu_custom_call.1} parent=1 // pred_check
      _
    $region7: #{tpu_custom_call.1} parent=1 // pred_check_branch
      %24 = sbr.rel (0) target = $region9
    $region8: #{tpu_custom_call.1} parent=1 // pred_region
      %s26 = ssub.s32 256, 256
      %27 = vsyncadd [#allocation6], %s26
      %s28 = sshll.u32 [#allocation5], 4
      %s29 = int_to_ptr.vmem [resolvable:$true] %s28
      %34 = dma.hbm_to_vmem [thread:$0]  %s1, 256, %s29, [#allocation6], 128, 128, 8
    $region9: #{tpu_custom_call.1} parent=1 // pred_fallthru
      _
    // Predicated region
    $region10: #{tpu_custom_call.1} parent=1 // pred_check
      _
    $region11: #{tpu_custom_call.1} parent=1 // pred_check_branch
      %36 = sbr.rel (0) target = $region13
    $region12: #{tpu_custom_call.1} parent=1 // pred_region
      %s38 = ssub.s32 256, 256
      %39 = vsyncadd [#allocation6], %s38
      %s40 = sshll.u32 [#allocation7], 4
      %s41 = int_to_ptr.vmem [resolvable:$true] %s40
      %46 = dma.hbm_to_vmem [thread:$0]  %s2, 256, %s41, [#allocation6], 128, 128, 8
    $region13: #{tpu_custom_call.1} parent=1 // pred_fallthru
      _
    // Predicated region
    $region14: #{tpu_custom_call.1} parent=1 // pred_check
      _
    $region15: #{tpu_custom_call.1} parent=1 // pred_check_branch
      %48 = sbr.rel (0) target = $region17
    $region16: #{tpu_custom_call.1} parent=1 // pred_region
      %49 = dma.done [#allocation3], 256
    $region17: #{tpu_custom_call.1} parent=1 // pred_fallthru
      _
    // Predicated region
    $region18: #{tpu_custom_call.1} parent=1 // pred_check
      _
    $region19: #{tpu_custom_call.1} parent=1 // pred_check_branch
      %51 = sbr.rel (0) target = $region21
    $region20: #{tpu_custom_call.1} parent=1 // pred_region
      %52 = dma.done [#allocation6], 256
    $region21: #{tpu_custom_call.1} parent=1 // pred_fallthru
      _
    // Predicated region
    $region22: #{tpu_custom_call.1} parent=1 // pred_check
      _
    $region23: #{tpu_custom_call.1} parent=1 // pred_check_branch
      %54 = sbr.rel (0) target = $region25
    $region24: #{tpu_custom_call.1} parent=1 // pred_region
      %55 = dma.done [#allocation6], 256
    $region25: #{tpu_custom_call.1} parent=1 // pred_fallthru
      _
    %v56 = vld [vmem:[#allocation2] sm:$0xff]
    %v57 = vld [vmem:[#allocation2 + $0x8] sm:$0xff]
    %v58 = vld [vmem:[#allocation5] sm:$0xff]
    %v59 = vld [vmem:[#allocation5 + $0x8] sm:$0xff]
    %v60 = vld [vmem:[#allocation7] sm:$0xff]
    %v61 = vld [vmem:[#allocation7 + $0x8] sm:$0xff]
    %64 = vrot.lane.b32.xlu0 %v58, 32
    %v65 = vpop.permute.xlu0 %64
    %66 = vrot.lane.b32.xlu0 %v59, 32
    %v67 = vpop.permute.xlu0 %66
    %72 = vrot.lane.b32.xlu0 %v60, 80
    %v73 = vpop.permute.xlu0 %72
    %74 = vrot.lane.b32.xlu0 %v61, 80
    %v75 = vpop.permute.xlu0 %74
    %vm78 = vcmask 261120
    %v79 = vsel %vm78, %v56, %v65
    %v80 = vsel %vm78, %v57, %v67
    %vm81 = vcmask 654336
    %v82 = vsel %vm81, %v79, %v73
    %v83 = vsel %vm81, %v80, %v75
    %vm84 = vcmask 785408
    %v85 = vsel %vm84, %v82, 0.0
    %v86 = vsel %vm84, %v83, 0.0
    %87 = vst [vmem:[#allocation8] sm:$0xff] %v85
    %88 = vst [vmem:[#allocation8 + $0x8] sm:$0xff] %v86
    // Predicated region
    $region26: #{tpu_custom_call.1} parent=1 // pred_check
      _
    $region27: #{tpu_custom_call.1} parent=1 // pred_check_branch
      %90 = sbr.rel (0) target = $region29
    $region28: #{tpu_custom_call.1} parent=1 // pred_region
      %s92 = ssub.s32 256, 256
      %93 = vsyncadd [#allocation4], %s92
      %s94 = sshll.u32 [#allocation8], 4
      %s95 = int_to_ptr.vmem [resolvable:$true] %s94
      %100 = dma.vmem_to_hbm [thread:$0]  %s95, 256, %s3, [#allocation4], 128, 128, 8
    $region29: #{tpu_custom_call.1} parent=1 // pred_fallthru
      _
    // Predicated region
    $region30: #{tpu_custom_call.1} parent=1 // pred_check
      _
    $region31: #{tpu_custom_call.1} parent=1 // pred_check_branch
      %102 = sbr.rel (0) target = $region33
    $region32: #{tpu_custom_call.1} parent=1 // pred_region
      %103 = dma.done [#allocation4], 256
    $region33: #{tpu_custom_call.1} parent=1 // pred_fallthru
      _
    %104 = vsyncpa [#allocation3], 1
    %105 = vsyncpa [#allocation6], 1
    %106 = vsyncpa [#allocation4], 1

</llo_original>
